<compile_context>
chip_gen: v7x
topology: tpu7x:2x2x1
jax: 0.10.0
libtpu: 0.0.40
codegen_flags: <defaults>
</compile_context>

<pallas_src>
import functools

import jax
import jax.numpy as jnp
from jax.experimental import pallas as pl
from jax.experimental.pallas import tpu as pltpu


def _round_up(x, m):
    return (x + m - 1) // m * m


def actor_critic_kernel(xT_ref, act_ref,
                        w1_ref, b1_ref, w2_ref, b2_ref, w3_ref, b3_ref,
                        out_ref, *, action_dim):
    """One batch tile. All activations are [features, B_tile] (batch on lanes)."""
    xT = xT_ref[...]                                                   # [S, Bt]

    # Fused actor+value trunk: Linear->Tanh->Linear->Tanh->Linear (3 matmuls).
    h = jnp.tanh(jnp.dot(w1_ref[...], xT,
                         preferred_element_type=jnp.float32) + b1_ref[...])   # [2H, Bt]
    h = jnp.tanh(jnp.dot(w2_ref[...], h,
                         preferred_element_type=jnp.float32) + b2_ref[...])   # [2H, Bt]
    o3 = jnp.dot(w3_ref[...], h,
                 preferred_element_type=jnp.float32) + b3_ref[...]            # [R, Bt]

    logits = o3[:action_dim, :]                                        # [A, Bt]
    value = o3[action_dim:action_dim + 1, :]                           # [1, Bt]

    # Numerically-stable softmax / log-softmax over the action (sublane) axis.
    m = jnp.max(logits, axis=0, keepdims=True)                         # [1, Bt]
    e = jnp.exp(logits - m)
    z = jnp.sum(e, axis=0, keepdims=True)                              # [1, Bt]
    probs = e * pl.reciprocal(z, approx=True)                          # EUP vrcp slot
    log_probs = (logits - m) - jnp.log(z)                              # [A, Bt]

    # Categorical.entropy() = -sum p * log p
    ent = -jnp.sum(probs * log_probs, axis=0, keepdims=True)           # [1, Bt]

    # Categorical.log_prob(action): one-hot gather over the action axis.
    a = act_ref[...]                                                   # [1, Bt] int32
    row = jax.lax.broadcasted_iota(jnp.int32, logits.shape, 0)
    onehot = (row == a).astype(jnp.float32)
    alp = jnp.sum(onehot * log_probs, axis=0, keepdims=True)           # [1, Bt]

    # Single lane-dense packed store: row 0=logprob, 1=value, 2=entropy, 3..7=0.
    prow = jax.lax.broadcasted_iota(jnp.int32, out_ref.shape, 0)
    packed = jnp.where(prow == 0, alp,
             jnp.where(prow == 1, value,
             jnp.where(prow == 2, ent, 0.0)))
    out_ref[...] = packed


def _fuse_params(p):
    """Fuse actor/value heads into one trunk; weights stored [out, in] so the
    kernel runs with batch on the lane axis (plain row-major matmuls)."""
    S, H = p["wa1"].shape
    A = p["wa3"].shape[1]
    f32 = jnp.float32

    w1 = jnp.concatenate([p["wa1"], p["wv1"]], axis=1).T.astype(f32)     # [2H, S]
    b1 = jnp.concatenate([p["ba1"], p["bv1"]], axis=1).T.astype(f32)     # [2H, 1]

    zhh = jnp.zeros((H, H), f32)                                         # block-diag layer 2
    w2 = jnp.concatenate([
        jnp.concatenate([p["wa2"].T, zhh], axis=1),
        jnp.concatenate([zhh, p["wv2"].T], axis=1)], axis=0).astype(f32)  # [2H, 2H]
    b2 = jnp.concatenate([p["ba2"], p["bv2"]], axis=1).T.astype(f32)      # [2H, 1]

    rows = _round_up(A + 1, 8)                  # pad output rows to a sublane group
    w3 = jnp.zeros((rows, 2 * H), f32)
    w3 = w3.at[:A, :H].set(p["wa3"].T)          # actor logits rows
    w3 = w3.at[A, H:].set(p["wv3"][:, 0])       # value row
    b3 = jnp.zeros((rows, 1), f32)
    b3 = b3.at[:A, 0].set(p["ba3"][0])
    b3 = b3.at[A, 0].set(p["bv3"][0, 0])
    return (w1, b1, w2, b2, w3, b3), A


def actor_critic_evaluate(state, action, params, *, block_b=512):
    """Pallas equivalent of ActorCritic.evaluate(state, action).

    Returns (action_logprobs [B], state_value [B], dist_entropy [B]).
    """
    B, S = state.shape
    (w1, b1, w2, b2, w3, b3), A = _fuse_params(params)

    # Lane-dense batch tile (multiple of 128), capped at block_b.
    bt = min(block_b, _round_up(B, 128))
    B_pad = _round_up(B, bt)
    grid = (B_pad // bt,)

    # Layout plumbing only: put the batch on the lane axis and pad it.
    xT = jnp.pad(state.astype(jnp.float32).T, ((0, 0), (0, B_pad - B)))   # [S, B_pad]
    aT = jnp.pad(action.astype(jnp.int32).reshape(1, B),
                 ((0, 0), (0, B_pad - B)))                                # [1, B_pad]

    tile_map = lambda i: (0, i)     # batch-tiled arrays (pipelined HBM<->VMEM)
    whole_map = lambda i: (0, 0)    # weights: same block every step -> VMEM-resident

    grid_spec = pltpu.PrefetchScalarGridSpec(
        num_scalar_prefetch=0,
        grid=grid,
        in_specs=[
            pl.BlockSpec((S, bt), tile_map),     # state (transposed)
            pl.BlockSpec((1, bt), tile_map),     # actions
            pl.BlockSpec(w1.shape, whole_map),
            pl.BlockSpec(b1.shape, whole_map),
            pl.BlockSpec(w2.shape, whole_map),
            pl.BlockSpec(b2.shape, whole_map),
            pl.BlockSpec(w3.shape, whole_map),
            pl.BlockSpec(b3.shape, whole_map),
        ],
        out_specs=pl.BlockSpec((8, bt), tile_map),
    )

    packed = pl.pallas_call(
        functools.partial(actor_critic_kernel, action_dim=A),
        out_shape=jax.ShapeDtypeStruct((8, B_pad), jnp.float32),
        grid_spec=grid_spec,
        compiler_params=pltpu.CompilerParams(
            dimension_semantics=("parallel",),     # megacore sharding on v7x
            vmem_limit_bytes=32 * 1024 * 1024,     # fits v5e/v6e/v7x budgets
        ),
    )(xT, aT, w1, b1, w2, b2, w3, b3)

    # Row 0 = log-prob, 1 = value (torch.squeeze), 2 = entropy; trim batch pad.
    return packed[0, :B], packed[1, :B], packed[2, :B]


def init_params(key, state_dim, action_dim, n_latent_var):
    """Deterministic init mimicking nn.Linear (uniform +-1/sqrt(fan_in)).
    Weights stored as [in, out] (transpose of PyTorch's [out, in])."""
    def linear(k, fan_in, fan_out):
        kw, kb = jax.random.split(k)
        bound = 1.0 / jnp.sqrt(fan_in)
        w = jax.random.uniform(kw, (fan_in, fan_out), jnp.float32, -bound, bound)
        b = jax.random.uniform(kb, (1, fan_out), jnp.float32, -bound, bound)
        return w, b

    keys = jax.random.split(key, 6)
    wa1, ba1 = linear(keys[0], state_dim, n_latent_var)
    wa2, ba2 = linear(keys[1], n_latent_var, n_latent_var)
    wa3, ba3 = linear(keys[2], n_latent_var, action_dim)
    wv1, bv1 = linear(keys[3], state_dim, n_latent_var)
    wv2, bv2 = linear(keys[4], n_latent_var, n_latent_var)
    wv3, bv3 = linear(keys[5], n_latent_var, 1)
    return dict(wa1=wa1, ba1=ba1, wa2=wa2, ba2=ba2, wa3=wa3, ba3=ba3,
                wv1=wv1, bv1=bv1, wv2=wv2, bv2=bv2, wv3=wv3, bv3=bv3)


def _reference(state, action, p):
    """Pure-JAX reference for verification (unfused, per-head)."""
    h = jnp.tanh(state @ p["wa1"] + p["ba1"])
    h = jnp.tanh(h @ p["wa2"] + p["ba2"])
    logits = h @ p["wa3"] + p["ba3"]
    logp = jax.nn.log_softmax(logits, axis=-1)
    probs = jnp.exp(logp)
    ent = -jnp.sum(probs * logp, axis=-1)
    alp = jnp.take_along_axis(logp, action[:, None].astype(jnp.int32), axis=-1)[:, 0]
    v = jnp.tanh(state @ p["wv1"] + p["bv1"])
    v = jnp.tanh(v @ p["wv2"] + p["bv2"])
    v = (v @ p["wv3"] + p["bv3"])[:, 0]
    return alp, v, ent


if __name__ == "__main__":
    # Shapes consistent with the module: state_dim=8, action_dim=4, hidden=32.
    state_dim, action_dim, n_latent_var = 8, 4, 32

    key = jax.random.PRNGKey(0)
    kp, ks, ka = jax.random.split(key, 3)
    params = init_params(kp, state_dim, action_dim, n_latent_var)

    # Small demo batch (single grid step).
    batch = 8
    state = jax.random.normal(ks, (batch, state_dim), dtype=jnp.float32)
    action = jax.random.randint(ka, (batch,), 0, action_dim, dtype=jnp.int32)

    logp, value, ent = actor_critic_evaluate(state, action, params)
    jax.block_until_ready((logp, value, ent))

    rl, rv, re = _reference(state, action, params)
    assert jnp.allclose(logp, rl, atol=1e-4), "logprob mismatch"
    assert jnp.allclose(value, rv, atol=1e-4), "value mismatch"
    # entropy goes through the approximate (EUP) reciprocal -> looser tolerance
    assert jnp.allclose(ent, re, atol=5e-2), "entropy mismatch"

    # Larger, non-multiple batch exercising a multi-step pipelined grid.
    ks2, ka2 = jax.random.split(jax.random.PRNGKey(1))
    B2 = 600
    state2 = jax.random.normal(ks2, (B2, state_dim), dtype=jnp.float32)
    action2 = jax.random.randint(ka2, (B2,), 0, action_dim, dtype=jnp.int32)
    logp2, value2, ent2 = actor_critic_evaluate(state2, action2, params)
    jax.block_until_ready((logp2, value2, ent2))
    rl2, rv2, re2 = _reference(state2, action2, params)
    assert jnp.allclose(logp2, rl2, atol=1e-4), "logprob mismatch (grid>1)"
    assert jnp.allclose(value2, rv2, atol=1e-4), "value mismatch (grid>1)"
    assert jnp.allclose(ent2, re2, atol=5e-2), "entropy mismatch (grid>1)"

    print("KERNEL_OK")
</pallas_src>

<mosaic_0001>
module attributes {stable_mosaic.version = 11 : i64} {
  func.func @actor_critic_kernel(%arg0: i32, %arg1: memref<8x128xf32, #tpu.memory_space<vmem>>, %arg2: memref<1x128xi32, #tpu.memory_space<vmem>>, %arg3: memref<64x8xf32, #tpu.memory_space<vmem>>, %arg4: memref<64x1xf32, #tpu.memory_space<vmem>>, %arg5: memref<64x64xf32, #tpu.memory_space<vmem>>, %arg6: memref<64x1xf32, #tpu.memory_space<vmem>>, %arg7: memref<8x64xf32, #tpu.memory_space<vmem>>, %arg8: memref<8x1xf32, #tpu.memory_space<vmem>>, %arg9: memref<8x128xf32, #tpu.memory_space<vmem>>) attributes {dimension_semantics = [#tpu.dimension_semantics<parallel>], iteration_bounds = array<i64: 1>, scalar_prefetch = 0 : i64, scratch_operands = 0 : i64, tpu.core_type = #tpu.core_type<tc>, window_params = [{transform_indices = @transform_0, window_bounds = array<i64: 8, 128>}, {transform_indices = @transform_1, window_bounds = array<i64: 1, 128>}, {pipeline_mode = #tpu.pipeline_mode<synchronous>, transform_indices = @transform_2, window_bounds = array<i64: 64, 8>}, {pipeline_mode = #tpu.pipeline_mode<synchronous>, transform_indices = @transform_3, window_bounds = array<i64: 64, 1>}, {pipeline_mode = #tpu.pipeline_mode<synchronous>, transform_indices = @transform_4, window_bounds = array<i64: 64, 64>}, {pipeline_mode = #tpu.pipeline_mode<synchronous>, transform_indices = @transform_5, window_bounds = array<i64: 64, 1>}, {pipeline_mode = #tpu.pipeline_mode<synchronous>, transform_indices = @transform_6, window_bounds = array<i64: 8, 64>}, {pipeline_mode = #tpu.pipeline_mode<synchronous>, transform_indices = @transform_7, window_bounds = array<i64: 8, 1>}, {transform_indices = @transform_8, window_bounds = array<i64: 8, 128>}]} {
    %c0 = arith.constant 0 : index
    %c0_0 = arith.constant 0 : index
    %0 = vector.load %arg1[%c0, %c0_0] : memref<8x128xf32, #tpu.memory_space<vmem>>, vector<8x128xf32>
    %c0_1 = arith.constant 0 : index
    %c0_2 = arith.constant 0 : index
    %1 = vector.load %arg3[%c0_1, %c0_2] : memref<64x8xf32, #tpu.memory_space<vmem>>, vector<64x8xf32>
    %cst = arith.constant dense<0.000000e+00> : vector<64x128xf32>
    %2 = tpu.matmul %1, %0, %cst {dimension_numbers = #tpu.dot_dimension_numbers<[1], [0], [0], [1], [0, 0, 1, 1], [], []>} : vector<64x8xf32>, vector<8x128xf32>, vector<64x128xf32> -> vector<64x128xf32>
    %c0_3 = arith.constant 0 : index
    %c0_4 = arith.constant 0 : index
    %3 = vector.load %arg4[%c0_3, %c0_4] : memref<64x1xf32, #tpu.memory_space<vmem>>, vector<64x1xf32>
    %4 = vector.broadcast %3 : vector<64x1xf32> to vector<64x128xf32>
    %5 = arith.addf %2, %4 : vector<64x128xf32>
    %6 = math.tanh %5 : vector<64x128xf32>
    %c0_5 = arith.constant 0 : index
    %c0_6 = arith.constant 0 : index
    %7 = vector.load %arg5[%c0_5, %c0_6] : memref<64x64xf32, #tpu.memory_space<vmem>>, vector<64x64xf32>
    %cst_7 = arith.constant dense<0.000000e+00> : vector<64x128xf32>
    %8 = tpu.matmul %7, %6, %cst_7 {dimension_numbers = #tpu.dot_dimension_numbers<[1], [0], [0], [1], [0, 0, 1, 1], [], []>} : vector<64x64xf32>, vector<64x128xf32>, vector<64x128xf32> -> vector<64x128xf32>
    %c0_8 = arith.constant 0 : index
    %c0_9 = arith.constant 0 : index
    %9 = vector.load %arg6[%c0_8, %c0_9] : memref<64x1xf32, #tpu.memory_space<vmem>>, vector<64x1xf32>
    %10 = vector.broadcast %9 : vector<64x1xf32> to vector<64x128xf32>
    %11 = arith.addf %8, %10 : vector<64x128xf32>
    %12 = math.tanh %11 : vector<64x128xf32>
    %c0_10 = arith.constant 0 : index
    %c0_11 = arith.constant 0 : index
    %13 = vector.load %arg7[%c0_10, %c0_11] : memref<8x64xf32, #tpu.memory_space<vmem>>, vector<8x64xf32>
    %cst_12 = arith.constant dense<0.000000e+00> : vector<8x128xf32>
    %14 = tpu.matmul %13, %12, %cst_12 {dimension_numbers = #tpu.dot_dimension_numbers<[1], [0], [0], [1], [0, 0, 1, 1], [], []>} : vector<8x64xf32>, vector<64x128xf32>, vector<8x128xf32> -> vector<8x128xf32>
    %c0_13 = arith.constant 0 : index
    %c0_14 = arith.constant 0 : index
    %15 = vector.load %arg8[%c0_13, %c0_14] : memref<8x1xf32, #tpu.memory_space<vmem>>, vector<8x1xf32>
    %16 = vector.broadcast %15 : vector<8x1xf32> to vector<8x128xf32>
    %17 = arith.addf %14, %16 : vector<8x128xf32>
    %18 = vector.extract_strided_slice %17 {offsets = [0, 0], sizes = [4, 128], strides = [1, 1]} : vector<8x128xf32> to vector<4x128xf32>
    %19 = vector.extract_strided_slice %17 {offsets = [4, 0], sizes = [1, 128], strides = [1, 1]} : vector<8x128xf32> to vector<1x128xf32>
    %cst_15 = arith.constant dense<0xFF800000> : vector<128xf32>
    %20 = vector.multi_reduction <maximumf>, %18, %cst_15 [0] : vector<4x128xf32> to vector<128xf32>
    %21 = vector.shape_cast %20 : vector<128xf32> to vector<1x128xf32>
    %22 = vector.broadcast %21 : vector<1x128xf32> to vector<4x128xf32>
    %23 = arith.subf %18, %22 : vector<4x128xf32>
    %24 = math.exp %23 : vector<4x128xf32>
    %cst_16 = arith.constant dense<0.000000e+00> : vector<128xf32>
    %25 = vector.multi_reduction <add>, %24, %cst_16 [0] : vector<4x128xf32> to vector<128xf32>
    %26 = vector.shape_cast %25 : vector<128xf32> to vector<1x128xf32>
    %27 = tpu.reciprocal %26 {approx = true} : vector<1x128xf32> -> vector<1x128xf32>
    %28 = vector.broadcast %27 : vector<1x128xf32> to vector<4x128xf32>
    %29 = arith.mulf %24, %28 : vector<4x128xf32>
    %30 = vector.broadcast %21 : vector<1x128xf32> to vector<4x128xf32>
    %31 = arith.subf %18, %30 : vector<4x128xf32>
    %32 = math.log %26 : vector<1x128xf32>
    %33 = vector.broadcast %32 : vector<1x128xf32> to vector<4x128xf32>
    %34 = arith.subf %31, %33 : vector<4x128xf32>
    %35 = arith.mulf %29, %34 : vector<4x128xf32>
    %cst_17 = arith.constant dense<0.000000e+00> : vector<128xf32>
    %36 = vector.multi_reduction <add>, %35, %cst_17 [0] : vector<4x128xf32> to vector<128xf32>
    %37 = vector.shape_cast %36 : vector<128xf32> to vector<1x128xf32>
    %cst_18 = arith.constant 0.000000e+00 : f32
    %38 = vector.broadcast %cst_18 : f32 to vector<1x128xf32>
    %39 = arith.subf %38, %37 : vector<1x128xf32>
    %c0_19 = arith.constant 0 : index
    %c0_20 = arith.constant 0 : index
    %40 = vector.load %arg2[%c0_19, %c0_20] : memref<1x128xi32, #tpu.memory_space<vmem>>, vector<1x128xi32>
    %41 = tpu.iota {dimensions = array<i32: 0>} : vector<4x128xi32>
    %42 = vector.broadcast %40 : vector<1x128xi32> to vector<4x128xi32>
    %43 = arith.cmpi eq, %41, %42 : vector<4x128xi32>
    %44 = arith.extui %43 : vector<4x128xi1> to vector<4x128xi32>
    %45 = arith.sitofp %44 : vector<4x128xi32> to vector<4x128xf32>
    %46 = arith.mulf %45, %34 : vector<4x128xf32>
    %cst_21 = arith.constant dense<0.000000e+00> : vector<128xf32>
    %47 = vector.multi_reduction <add>, %46, %cst_21 [0] : vector<4x128xf32> to vector<128xf32>
    %48 = vector.shape_cast %47 : vector<128xf32> to vector<1x128xf32>
    %49 = tpu.iota {dimensions = array<i32: 0>} : vector<8x128xi32>
    %c0_i32 = arith.constant 0 : i32
    %50 = vector.broadcast %c0_i32 : i32 to vector<8x128xi32>
    %51 = arith.cmpi eq, %49, %50 : vector<8x128xi32>
    %c1_i32 = arith.constant 1 : i32
    %52 = vector.broadcast %c1_i32 : i32 to vector<8x128xi32>
    %53 = arith.cmpi eq, %49, %52 : vector<8x128xi32>
    %c2_i32 = arith.constant 2 : i32
    %54 = vector.broadcast %c2_i32 : i32 to vector<8x128xi32>
    %55 = arith.cmpi eq, %49, %54 : vector<8x128xi32>
    %cst_22 = arith.constant 0.000000e+00 : f32
    %56 = vector.shape_cast %39 : vector<1x128xf32> to vector<1x128xf32>
    %57 = vector.broadcast %56 : vector<1x128xf32> to vector<8x128xf32>
    %58 = vector.broadcast %cst_22 : f32 to vector<8x128xf32>
    %59 = arith.select %55, %57, %58 : vector<8x128xi1>, vector<8x128xf32>
    %60 = vector.shape_cast %19 : vector<1x128xf32> to vector<1x128xf32>
    %61 = vector.broadcast %60 : vector<1x128xf32> to vector<8x128xf32>
    %62 = arith.select %53, %61, %59 : vector<8x128xi1>, vector<8x128xf32>
    %63 = vector.shape_cast %48 : vector<1x128xf32> to vector<1x128xf32>
    %64 = vector.broadcast %63 : vector<1x128xf32> to vector<8x128xf32>
    %65 = arith.select %51, %64, %62 : vector<8x128xi1>, vector<8x128xf32>
    %c0_23 = arith.constant 0 : index
    %c0_24 = arith.constant 0 : index
    %66 = vector.load %arg9[%c0_23, %c0_24] : memref<8x128xf32, #tpu.memory_space<vmem>>, vector<8x128xf32>
    tpu.vector_store %arg9[%c0_23, %c0_24], %65 {strides = array<i32>} : memref<8x128xf32, #tpu.memory_space<vmem>>, vector<8x128xf32>,
    return
  }
  func.func @transform_0(%arg0: i32) -> (i32, i32) {
    %c0_i32 = arith.constant 0 : i32
    %c0_i32_0 = arith.constant 0 : i32
    return %c0_i32, %arg0 : i32, i32
  }
  func.func @transform_1(%arg0: i32) -> (i32, i32) {
    %c0_i32 = arith.constant 0 : i32
    %c0_i32_0 = arith.constant 0 : i32
    return %c0_i32, %arg0 : i32, i32
  }
  func.func @transform_2(%arg0: i32) -> (i32, i32) {
    %c0_i32 = arith.constant 0 : i32
    %c0_i32_0 = arith.constant 0 : i32
    %c0_i32_1 = arith.constant 0 : i32
    return %c0_i32, %c0_i32_0 : i32, i32
  }
  func.func @transform_3(%arg0: i32) -> (i32, i32) {
    %c0_i32 = arith.constant 0 : i32
    %c0_i32_0 = arith.constant 0 : i32
    %c0_i32_1 = arith.constant 0 : i32
    return %c0_i32, %c0_i32_0 : i32, i32
  }
  func.func @transform_4(%arg0: i32) -> (i32, i32) {
    %c0_i32 = arith.constant 0 : i32
    %c0_i32_0 = arith.constant 0 : i32
    %c0_i32_1 = arith.constant 0 : i32
    return %c0_i32, %c0_i32_0 : i32, i32
  }
  func.func @transform_5(%arg0: i32) -> (i32, i32) {
    %c0_i32 = arith.constant 0 : i32
    %c0_i32_0 = arith.constant 0 : i32
    %c0_i32_1 = arith.constant 0 : i32
    return %c0_i32, %c0_i32_0 : i32, i32
  }
  func.func @transform_6(%arg0: i32) -> (i32, i32) {
    %c0_i32 = arith.constant 0 : i32
    %c0_i32_0 = arith.constant 0 : i32
    %c0_i32_1 = arith.constant 0 : i32
    return %c0_i32, %c0_i32_0 : i32, i32
  }
  func.func @transform_7(%arg0: i32) -> (i32, i32) {
    %c0_i32 = arith.constant 0 : i32
    %c0_i32_0 = arith.constant 0 : i32
    %c0_i32_1 = arith.constant 0 : i32
    return %c0_i32, %c0_i32_0 : i32, i32
  }
  func.func @transform_8(%arg0: i32) -> (i32, i32) {
    %c0_i32 = arith.constant 0 : i32
    %c0_i32_0 = arith.constant 0 : i32
    return %c0_i32, %arg0 : i32, i32
  }
}

</mosaic_0001>

<llo_original>
// kernel: tpu_custom_call.1
$region0: #{tpu_custom_call.1}
  #allocation0 [shape = 'u32[]', space=smem, size = 0x4, offset = 0x4, fixed_abs, tag = 'smem constant byte address 0x4 - core index']
  #allocation1 [shape = 'u32[144,128]{1,0:T(1,128)}', space=vmem, size = 0x12000, scoped, tag = 'internal scratch']
  %s0 = inlined_call_operand.vmem [shape: f32[8,128], index: 0, kind: input, shape index: {}]
  %s1 = inlined_call_operand.vmem [shape: s32[1,128], index: 1, kind: input, shape index: {}]
  %s2 = inlined_call_operand.vmem [shape: f32[64,8], index: 2, kind: input, shape index: {}]
  %s3 = inlined_call_operand.vmem [shape: f32[64,1], index: 3, kind: input, shape index: {}]
  %s4 = inlined_call_operand.vmem [shape: f32[64,64], index: 4, kind: input, shape index: {}]
  %s5 = inlined_call_operand.vmem [shape: f32[64,1], index: 5, kind: input, shape index: {}]
  %s6 = inlined_call_operand.vmem [shape: f32[8,64], index: 6, kind: input, shape index: {}]
  %s7 = inlined_call_operand.vmem [shape: f32[8,1], index: 7, kind: input, shape index: {}]
  %s8 = inlined_call_operand.hbm [shape: f32[8,128], index: 8, kind: output, shape index: {}]
  %s9 = sld [smem:[#allocation0]]
  $region42: #{tpu_custom_call.1} parent=0
    _
  %s11 = ssub.s32 1, %s9
  %s12 = scalar_select 0, %s11, %s9
  $region1: #{tpu_custom_call.1} parent=0
    #allocation2 [shape = 'u8[4096]{0}', space=vmem, size = 0x1000, scoped, tag = 'output window, operand 0, single buffered']
    #allocation3 [shape = 's32[1]{0}', space=sflag, size = 0x4, scoped, tag = 'scoped memory for tpu_custom_call.1']
    %13 = vsyncpa [#allocation3], 0
    // Predicated region
    $region2: #{tpu_custom_call.1} parent=1 // pred_check
      _
    $region3: #{tpu_custom_call.1} parent=1 // pred_check_branch
      %15 = sbr.rel (0) target = $region5
    $region4: #{tpu_custom_call.1} parent=1 // pred_region
      _
    $region5: #{tpu_custom_call.1} parent=1 // pred_fallthru
      _
    // Predicated region
    $region6: #{tpu_custom_call.1} parent=1 // pred_check
      _
    $region7: #{tpu_custom_call.1} parent=1 // pred_check_branch
      %17 = sbr.rel (0) target = $region9
    $region8: #{tpu_custom_call.1} parent=1 // pred_region
      _
    $region9: #{tpu_custom_call.1} parent=1 // pred_fallthru
      _
    // Predicated region
    $region10: #{tpu_custom_call.1} parent=1 // pred_check
      _
    $region11: #{tpu_custom_call.1} parent=1 // pred_check_branch
      %19 = sbr.rel (0) target = $region13
    $region12: #{tpu_custom_call.1} parent=1 // pred_region
      _
    $region13: #{tpu_custom_call.1} parent=1 // pred_fallthru
      _
    // Predicated region
    $region14: #{tpu_custom_call.1} parent=1 // pred_check
      _
    $region15: #{tpu_custom_call.1} parent=1 // pred_check_branch
      %21 = sbr.rel (0) target = $region17
    $region16: #{tpu_custom_call.1} parent=1 // pred_region
      _
    $region17: #{tpu_custom_call.1} parent=1 // pred_fallthru
      _
    // Predicated region
    $region18: #{tpu_custom_call.1} parent=1 // pred_check
      _
    $region19: #{tpu_custom_call.1} parent=1 // pred_check_branch
      %23 = sbr.rel (0) target = $region21
    $region20: #{tpu_custom_call.1} parent=1 // pred_region
      _
    $region21: #{tpu_custom_call.1} parent=1 // pred_fallthru
      _
    // Predicated region
    $region22: #{tpu_custom_call.1} parent=1 // pred_check
      _
    $region23: #{tpu_custom_call.1} parent=1 // pred_check_branch
      %25 = sbr.rel (0) target = $region25
    $region24: #{tpu_custom_call.1} parent=1 // pred_region
      _
    $region25: #{tpu_custom_call.1} parent=1 // pred_fallthru
      _
    // Predicated region
    $region26: #{tpu_custom_call.1} parent=1 // pred_check
      _
    $region27: #{tpu_custom_call.1} parent=1 // pred_check_branch
      %27 = sbr.rel (0) target = $region29
    $region28: #{tpu_custom_call.1} parent=1 // pred_region
      _
    $region29: #{tpu_custom_call.1} parent=1 // pred_fallthru
      _
    // Predicated region
    $region30: #{tpu_custom_call.1} parent=1 // pred_check
      _
    $region31: #{tpu_custom_call.1} parent=1 // pred_check_branch
      %29 = sbr.rel (0) target = $region33
    $region32: #{tpu_custom_call.1} parent=1 // pred_region
      _
    $region33: #{tpu_custom_call.1} parent=1 // pred_fallthru
      _
    %v30 = vld [vmem:[%s0] sm:$0xff]
    %v31 = vld [vmem:[%s2] sm:$0xff]
    %v32 = vld [vmem:[%s2 + $0x8] sm:$0xff]
    %v33 = vld [vmem:[%s2 + $0x10] sm:$0xff]
    %v34 = vld [vmem:[%s2 + $0x18] sm:$0xff]
    %v35 = vld [vmem:[%s2 + $0x20] sm:$0xff]
    %v36 = vld [vmem:[%s2 + $0x28] sm:$0xff]
    %v37 = vld [vmem:[%s2 + $0x30] sm:$0xff]
    %v38 = vld [vmem:[%s2 + $0x38] sm:$0xff]
    %v39 = vld [vmem:[%s3] sm:$0xff]
    %v40 = vld [vmem:[%s3 + $0x8] sm:$0xff]
    %v41 = vld [vmem:[%s3 + $0x10] sm:$0xff]
    %v42 = vld [vmem:[%s3 + $0x18] sm:$0xff]
    %v43 = vld [vmem:[%s3 + $0x20] sm:$0xff]
    %v44 = vld [vmem:[%s3 + $0x28] sm:$0xff]
    %v45 = vld [vmem:[%s3 + $0x30] sm:$0xff]
    %v46 = vld [vmem:[%s3 + $0x38] sm:$0xff]
    %48 = vset.pattern.permute.xlu0 0
    %49 = vperm.xlu0 %48, %v39
    %v50 = vpop.permute.xlu0 %49
    %53 = vset.pattern.permute.xlu0 0
    %54 = vperm.xlu0 %53, %v40
    %v55 = vpop.permute.xlu0 %54
    %58 = vset.pattern.permute.xlu0 0
    %59 = vperm.xlu0 %58, %v41
    %v60 = vpop.permute.xlu0 %59
    %63 = vset.pattern.permute.xlu0 0
    %64 = vperm.xlu0 %63, %v42
    %v65 = vpop.permute.xlu0 %64
    %68 = vset.pattern.permute.xlu0 0
    %69 = vperm.xlu0 %68, %v43
    %v70 = vpop.permute.xlu0 %69
    %73 = vset.pattern.permute.xlu0 0
    %74 = vperm.xlu0 %73, %v44
    %v75 = vpop.permute.xlu0 %74
    %78 = vset.pattern.permute.xlu0 0
    %79 = vperm.xlu0 %78, %v45
    %v80 = vpop.permute.xlu0 %79
    %83 = vset.pattern.permute.xlu0 0
    %84 = vperm.xlu0 %83, %v46
    %v85 = vpop.permute.xlu0 %84
    %vm87 = vcmask 64512
    %v89 = vsel %vm87, %v31, 0
    %v92 = vsel %vm87, %v32, 0
    %v95 = vsel %vm87, %v33, 0
    %v98 = vsel %vm87, %v34, 0
    %v101 = vsel %vm87, %v35, 0
    %v104 = vsel %vm87, %v36, 0
    %v107 = vsel %vm87, %v37, 0
    %v110 = vsel %vm87, %v38, 0
    %112 = vmatprep.subr.mxu0 0.0
    %113 = vmatpush1.msra.mxu0 %v30
    %114 = vmatprep.subr.mxu0 0.0
    %115 = vmatpush1.msra.mxu0 0.0
    %116 = vmatprep.subr.mxu0 0.0
    %117 = vmatpush1.msra.mxu0 0.0
    %118 = vmatprep.subr.mxu0 0.0
    %119 = vmatpush1.msra.mxu0 0.0
    %120 = vmatprep.subr.mxu0 0.0
    %121 = vmatpush1.msra.mxu0 0.0
    %122 = vmatprep.subr.mxu0 0.0
    %123 = vmatpush1.msra.mxu0 0.0
    %124 = vmatprep.subr.mxu0 0.0
    %125 = vmatpush1.msra.mxu0 0.0
    %126 = vmatprep.subr.mxu0 0.0
    %127 = vmatpush1.msra.mxu0 0.0
    %128 = vmatprep.subr.mxu0 0.0
    %129 = vmatpush1.msra.mxu0 0.0
    %130 = vmatprep.subr.mxu0 0.0
    %131 = vmatpush1.msra.mxu0 0.0
    %132 = vmatprep.subr.mxu0 0.0
    %133 = vmatpush1.msra.mxu0 0.0
    %134 = vmatprep.subr.mxu0 0.0
    %135 = vmatpush1.msra.mxu0 0.0
    %136 = vmatprep.subr.mxu0 0.0
    %137 = vmatpush1.msra.mxu0 0.0
    %138 = vmatprep.subr.mxu0 0.0
    %139 = vmatpush1.msra.mxu0 0.0
    %140 = vmatprep.subr.mxu0 0.0
    %141 = vmatpush1.msra.mxu0 0.0
    %142 = vmatprep.subr.mxu0 0.0
    %143 = vmatpush1.msra.mxu0 0.0
    %144 = vmatprep.subr.mxu0 0.0
    %145 = vmatpush1.msra.mxu0 0.0
    %146 = vmatprep.subr.mxu0 0.0
    %147 = vmatpush1.msra.mxu0 0.0
    %148 = vmatprep.subr.mxu0 0.0
    %149 = vmatpush1.msra.mxu0 0.0
    %150 = vmatprep.subr.mxu0 0.0
    %151 = vmatpush1.msra.mxu0 0.0
    %152 = vmatprep.subr.mxu0 0.0
    %153 = vmatpush1.msra.mxu0 0.0
    %154 = vmatprep.subr.mxu0 0.0
    %155 = vmatpush1.msra.mxu0 0.0
    %156 = vmatprep.subr.mxu0 0.0
    %157 = vmatpush1.msra.mxu0 0.0
    %158 = vmatprep.subr.mxu0 0.0
    %159 = vmatpush1.msra.mxu0 0.0
    %160 = vmatprep.subr.mxu0 0.0
    %161 = vmatpush1.msra.mxu0 0.0
    %162 = vmatprep.subr.mxu0 0.0
    %163 = vmatpush1.msra.mxu0 0.0
    %164 = vmatprep.subr.mxu0 0.0
    %165 = vmatpush1.msra.mxu0 0.0
    %166 = vmatprep.subr.mxu0 0.0
    %167 = vmatpush1.msra.mxu0 0.0
    %168 = vmatprep.subr.mxu0 0.0
    %169 = vmatpush1.msra.mxu0 0.0
    %170 = vmatprep.subr.mxu0 0.0
    %171 = vmatpush1.msra.mxu0 0.0
    %172 = vmatprep.subr.mxu0 0.0
    %173 = vmatpush1.msra.mxu0 0.0
    %174 = vmatprep.subr.mxu0 0.0
    %175 = vmatpush1.msra.mxu0 0.0
    %176 = vmatprep.mubr.f32.mxu0 0.0
    %177 = vmatmul.mubr.f32.gmra.mrb[0].mxu0 %v89
    %v178 = vpop.f32.mrb[0].mxu0
    %v179 = vadd.f32 %v50, %v178
    %v180 = vpop.f32.mrb[0].mxu0
    %181 = vmatprep.mubr.f32.mxu0 0.0
    %182 = vmatmul.mubr.f32.gmra.mrb[0].mxu0 %v92
    %v183 = vpop.f32.mrb[0].mxu0
    %v184 = vadd.f32 %v55, %v183
    %v185 = vpop.f32.mrb[0].mxu0
    %186 = vmatprep.mubr.f32.mxu0 0.0
    %187 = vmatmul.mubr.f32.gmra.mrb[0].mxu0 %v95
    %v188 = vpop.f32.mrb[0].mxu0
    %v189 = vadd.f32 %v60, %v188
    %v190 = vpop.f32.mrb[0].mxu0
    %191 = vmatprep.mubr.f32.mxu0 0.0
    %192 = vmatmul.mubr.f32.gmra.mrb[0].mxu0 %v98
    %v193 = vpop.f32.mrb[0].mxu0
    %v194 = vadd.f32 %v65, %v193
    %v195 = vpop.f32.mrb[0].mxu0
    %196 = vmatprep.mubr.f32.mxu0 0.0
    %197 = vmatmul.mubr.f32.gmra.mrb[0].mxu0 %v101
    %v198 = vpop.f32.mrb[0].mxu0
    %v199 = vadd.f32 %v70, %v198
    %v200 = vpop.f32.mrb[0].mxu0
    %201 = vmatprep.mubr.f32.mxu0 0.0
    %202 = vmatmul.mubr.f32.gmra.mrb[0].mxu0 %v104
    %v203 = vpop.f32.mrb[0].mxu0
    %v204 = vadd.f32 %v75, %v203
    %v205 = vpop.f32.mrb[0].mxu0
    %206 = vmatprep.mubr.f32.mxu0 0.0
    %207 = vmatmul.mubr.f32.gmra.mrb[0].mxu0 %v107
    %v208 = vpop.f32.mrb[0].mxu0
    %v209 = vadd.f32 %v80, %v208
    %v210 = vpop.f32.mrb[0].mxu0
    %211 = vmatprep.mubr.f32.mxu0 0.0
    %212 = vmatmul.mubr.f32.gmra.mrb[0].mxu0 %v110
    %v213 = vpop.f32.mrb[0].mxu0
    %v214 = vadd.f32 %v85, %v213
    %v215 = vpop.f32.mrb[0].mxu0
    %216 = vdwg.mxu0
    %v217 = vtanh.pop %v179
    %v218 = vtanh.pop %v184
    %v219 = vtanh.pop %v189
    %v220 = vtanh.pop %v194
    %v221 = vtanh.pop %v199
    %v222 = vtanh.pop %v204
    %v223 = vtanh.pop %v209
    %v224 = vtanh.pop %v214
    %v225 = vld [vmem:[%s4] sm:$0xff]
    %v226 = vld [vmem:[%s4 + $0x8] sm:$0xff]
    %v227 = vld [vmem:[%s4 + $0x10] sm:$0xff]
    %v228 = vld [vmem:[%s4 + $0x18] sm:$0xff]
    %v229 = vld [vmem:[%s4 + $0x20] sm:$0xff]
    %v230 = vld [vmem:[%s4 + $0x28] sm:$0xff]
    %v231 = vld [vmem:[%s4 + $0x30] sm:$0xff]
    %v232 = vld [vmem:[%s4 + $0x38] sm:$0xff]
    %v233 = vld [vmem:[%s5] sm:$0xff]
    %v234 = vld [vmem:[%s5 + $0x8] sm:$0xff]
    %v235 = vld [vmem:[%s5 + $0x10] sm:$0xff]
    %v236 = vld [vmem:[%s5 + $0x18] sm:$0xff]
    %v237 = vld [vmem:[%s5 + $0x20] sm:$0xff]
    %v238 = vld [vmem:[%s5 + $0x28] sm:$0xff]
    %v239 = vld [vmem:[%s5 + $0x30] sm:$0xff]
    %v240 = vld [vmem:[%s5 + $0x38] sm:$0xff]
    %242 = vset.pattern.permute.xlu0 0
    %243 = vperm.xlu0 %242, %v233
    %v244 = vpop.permute.xlu0 %243
    %247 = vset.pattern.permute.xlu0 0
    %248 = vperm.xlu0 %247, %v234
    %v249 = vpop.permute.xlu0 %248
    %252 = vset.pattern.permute.xlu0 0
    %253 = vperm.xlu0 %252, %v235
    %v254 = vpop.permute.xlu0 %253
    %257 = vset.pattern.permute.xlu0 0
    %258 = vperm.xlu0 %257, %v236
    %v259 = vpop.permute.xlu0 %258
    %262 = vset.pattern.permute.xlu0 0
    %263 = vperm.xlu0 %262, %v237
    %v264 = vpop.permute.xlu0 %263
    %267 = vset.pattern.permute.xlu0 0
    %268 = vperm.xlu0 %267, %v238
    %v269 = vpop.permute.xlu0 %268
    %272 = vset.pattern.permute.xlu0 0
    %273 = vperm.xlu0 %272, %v239
    %v274 = vpop.permute.xlu0 %273
    %277 = vset.pattern.permute.xlu0 0
    %278 = vperm.xlu0 %277, %v240
    %v279 = vpop.permute.xlu0 %278
    %vm281 = vcmask 523264
    %v283 = vsel %vm281, %v225, 0
    %v286 = vsel %vm281, %v226, 0
    %v289 = vsel %vm281, %v227, 0
    %v292 = vsel %vm281, %v228, 0
    %v295 = vsel %vm281, %v229, 0
    %v298 = vsel %vm281, %v230, 0
    %v301 = vsel %vm281, %v231, 0
    %v304 = vsel %vm281, %v232, 0
    %306 = vmatprep.subr.mxu0 0.0
    %307 = vmatpush1.msra.mxu0 %v217
    %308 = vmatprep.subr.mxu0 0.0
    %309 = vmatpush1.msra.mxu0 %v218
    %310 = vmatprep.subr.mxu0 0.0
    %311 = vmatpush1.msra.mxu0 %v219
    %312 = vmatprep.subr.mxu0 0.0
    %313 = vmatpush1.msra.mxu0 %v220
    %314 = vmatprep.subr.mxu0 0.0
    %315 = vmatpush1.msra.mxu0 %v221
    %316 = vmatprep.subr.mxu0 0.0
    %317 = vmatpush1.msra.mxu0 %v222
    %318 = vmatprep.subr.mxu0 0.0
    %319 = vmatpush1.msra.mxu0 %v223
    %320 = vmatprep.subr.mxu0 0.0
    %321 = vmatpush1.msra.mxu0 %v224
    %322 = vmatprep.subr.mxu0 0.0
    %323 = vmatpush1.msra.mxu0 0.0
    %324 = vmatprep.subr.mxu0 0.0
    %325 = vmatpush1.msra.mxu0 0.0
    %326 = vmatprep.subr.mxu0 0.0
    %327 = vmatpush1.msra.mxu0 0.0
    %328 = vmatprep.subr.mxu0 0.0
    %329 = vmatpush1.msra.mxu0 0.0
    %330 = vmatprep.subr.mxu0 0.0
    %331 = vmatpush1.msra.mxu0 0.0
    %332 = vmatprep.subr.mxu0 0.0
    %333 = vmatpush1.msra.mxu0 0.0
    %334 = vmatprep.subr.mxu0 0.0
    %335 = vmatpush1.msra.mxu0 0.0
    %336 = vmatprep.subr.mxu0 0.0
    %337 = vmatpush1.msra.mxu0 0.0
    %338 = vmatprep.subr.mxu0 0.0
    %339 = vmatpush1.msra.mxu0 0.0
    %340 = vmatprep.subr.mxu0 0.0
    %341 = vmatpush1.msra.mxu0 0.0
    %342 = vmatprep.subr.mxu0 0.0
    %343 = vmatpush1.msra.mxu0 0.0
    %344 = vmatprep.subr.mxu0 0.0
    %345 = vmatpush1.msra.mxu0 0.0
    %346 = vmatprep.subr.mxu0 0.0
    %347 = vmatpush1.msra.mxu0 0.0
    %348 = vmatprep.subr.mxu0 0.0
    %349 = vmatpush1.msra.mxu0 0.0
    %350 = vmatprep.subr.mxu0 0.0
    %351 = vmatpush1.msra.mxu0 0.0
    %352 = vmatprep.subr.mxu0 0.0
    %353 = vmatpush1.msra.mxu0 0.0
    %354 = vmatprep.subr.mxu0 0.0
    %355 = vmatpush1.msra.mxu0 0.0
    %356 = vmatprep.subr.mxu0 0.0
    %357 = vmatpush1.msra.mxu0 0.0
    %358 = vmatprep.subr.mxu0 0.0
    %359 = vmatpush1.msra.mxu0 0.0
    %360 = vmatprep.subr.mxu0 0.0
    %361 = vmatpush1.msra.mxu0 0.0
    %362 = vmatprep.subr.mxu0 0.0
    %363 = vmatpush1.msra.mxu0 0.0
    %364 = vmatprep.subr.mxu0 0.0
    %365 = vmatpush1.msra.mxu0 0.0
    %366 = vmatprep.subr.mxu0 0.0
    %367 = vmatpush1.msra.mxu0 0.0
    %368 = vmatprep.subr.mxu0 0.0
    %369 = vmatpush1.msra.mxu0 0.0
    %370 = vmatprep.mubr.f32.mxu0 0.0
    %371 = vmatmul.mubr.f32.gmra.mrb[0].mxu0 %v283
    %v372 = vpop.f32.mrb[0].mxu0
    %v373 = vadd.f32 %v244, %v372
    %v374 = vpop.f32.mrb[0].mxu0
    %375 = vmatprep.mubr.f32.mxu0 0.0
    %376 = vmatmul.mubr.f32.gmra.mrb[0].mxu0 %v286
    %v377 = vpop.f32.mrb[0].mxu0
    %v378 = vadd.f32 %v249, %v377
    %v379 = vpop.f32.mrb[0].mxu0
    %380 = vmatprep.mubr.f32.mxu0 0.0
    %381 = vmatmul.mubr.f32.gmra.mrb[0].mxu0 %v289
    %v382 = vpop.f32.mrb[0].mxu0
    %v383 = vadd.f32 %v254, %v382
    %v384 = vpop.f32.mrb[0].mxu0
    %385 = vmatprep.mubr.f32.mxu0 0.0
    %386 = vmatmul.mubr.f32.gmra.mrb[0].mxu0 %v292
    %v387 = vpop.f32.mrb[0].mxu0
    %v388 = vadd.f32 %v259, %v387
    %v389 = vpop.f32.mrb[0].mxu0
    %390 = vmatprep.mubr.f32.mxu0 0.0
    %391 = vmatmul.mubr.f32.gmra.mrb[0].mxu0 %v295
    %v392 = vpop.f32.mrb[0].mxu0
    %v393 = vadd.f32 %v264, %v392
    %v394 = vpop.f32.mrb[0].mxu0
    %395 = vmatprep.mubr.f32.mxu0 0.0
    %396 = vmatmul.mubr.f32.gmra.mrb[0].mxu0 %v298
    %v397 = vpop.f32.mrb[0].mxu0
    %v398 = vadd.f32 %v269, %v397
    %v399 = vpop.f32.mrb[0].mxu0
    %400 = vmatprep.mubr.f32.mxu0 0.0
    %401 = vmatmul.mubr.f32.gmra.mrb[0].mxu0 %v301
    %v402 = vpop.f32.mrb[0].mxu0
    %v403 = vadd.f32 %v274, %v402
    %v404 = vpop.f32.mrb[0].mxu0
    %405 = vmatprep.mubr.f32.mxu0 0.0
    %406 = vmatmul.mubr.f32.gmra.mrb[0].mxu0 %v304
    %v407 = vpop.f32.mrb[0].mxu0
    %v408 = vadd.f32 %v279, %v407
    %v409 = vpop.f32.mrb[0].mxu0
    %410 = vdwg.mxu0
    %v411 = vtanh.pop %v373
    %v412 = vtanh.pop %v378
    %v413 = vtanh.pop %v383
    %v414 = vtanh.pop %v388
    %v415 = vtanh.pop %v393
    %v416 = vtanh.pop %v398
    %v417 = vtanh.pop %v403
    %v418 = vtanh.pop %v408
    %v419 = vld [vmem:[%s6] sm:$0xff]
    %v420 = vld [vmem:[%s7] sm:$0xff]
    %422 = vset.pattern.permute.xlu0 0
    %423 = vperm.xlu0 %422, %v420
    %v424 = vpop.permute.xlu0 %423
    %v427 = vsel %vm281, %v419, 0
    %429 = vmatprep.subr.mxu0 0.0
    %430 = vmatpush1.msra.mxu0 %v411
    %431 = vmatprep.subr.mxu0 0.0
    %432 = vmatpush1.msra.mxu0 %v412
    %433 = vmatprep.subr.mxu0 0.0
    %434 = vmatpush1.msra.mxu0 %v413
    %435 = vmatprep.subr.mxu0 0.0
    %436 = vmatpush1.msra.mxu0 %v414
    %437 = vmatprep.subr.mxu0 0.0
    %438 = vmatpush1.msra.mxu0 %v415
    %439 = vmatprep.subr.mxu0 0.0
    %440 = vmatpush1.msra.mxu0 %v416
    %441 = vmatprep.subr.mxu0 0.0
    %442 = vmatpush1.msra.mxu0 %v417
    %443 = vmatprep.subr.mxu0 0.0
    %444 = vmatpush1.msra.mxu0 %v418
    %445 = vmatprep.subr.mxu0 0.0
    %446 = vmatpush1.msra.mxu0 0.0
    %447 = vmatprep.subr.mxu0 0.0
    %448 = vmatpush1.msra.mxu0 0.0
    %449 = vmatprep.subr.mxu0 0.0
    %450 = vmatpush1.msra.mxu0 0.0
    %451 = vmatprep.subr.mxu0 0.0
    %452 = vmatpush1.msra.mxu0 0.0
    %453 = vmatprep.subr.mxu0 0.0
    %454 = vmatpush1.msra.mxu0 0.0
    %455 = vmatprep.subr.mxu0 0.0
    %456 = vmatpush1.msra.mxu0 0.0
    %457 = vmatprep.subr.mxu0 0.0
    %458 = vmatpush1.msra.mxu0 0.0
    %459 = vmatprep.subr.mxu0 0.0
    %460 = vmatpush1.msra.mxu0 0.0
    %461 = vmatprep.subr.mxu0 0.0
    %462 = vmatpush1.msra.mxu0 0.0
    %463 = vmatprep.subr.mxu0 0.0
    %464 = vmatpush1.msra.mxu0 0.0
    %465 = vmatprep.subr.mxu0 0.0
    %466 = vmatpush1.msra.mxu0 0.0
    %467 = vmatprep.subr.mxu0 0.0
    %468 = vmatpush1.msra.mxu0 0.0
    %469 = vmatprep.subr.mxu0 0.0
    %470 = vmatpush1.msra.mxu0 0.0
    %471 = vmatprep.subr.mxu0 0.0
    %472 = vmatpush1.msra.mxu0 0.0
    %473 = vmatprep.subr.mxu0 0.0
    %474 = vmatpush1.msra.mxu0 0.0
    %475 = vmatprep.subr.mxu0 0.0
    %476 = vmatpush1.msra.mxu0 0.0
    %477 = vmatprep.subr.mxu0 0.0
    %478 = vmatpush1.msra.mxu0 0.0
    %479 = vmatprep.subr.mxu0 0.0
    %480 = vmatpush1.msra.mxu0 0.0
    %481 = vmatprep.subr.mxu0 0.0
    %482 = vmatpush1.msra.mxu0 0.0
    %483 = vmatprep.subr.mxu0 0.0
    %484 = vmatpush1.msra.mxu0 0.0
    %485 = vmatprep.subr.mxu0 0.0
    %486 = vmatpush1.msra.mxu0 0.0
    %487 = vmatprep.subr.mxu0 0.0
    %488 = vmatpush1.msra.mxu0 0.0
    %489 = vmatprep.subr.mxu0 0.0
    %490 = vmatpush1.msra.mxu0 0.0
    %491 = vmatprep.subr.mxu0 0.0
    %492 = vmatpush1.msra.mxu0 0.0
    %493 = vmatprep.mubr.f32.mxu0 0.0
    %494 = vmatmul.mubr.f32.gmra.mrb[0].mxu0 %v427
    %v495 = vpop.f32.mrb[0].mxu0
    %v496 = vadd.f32 %v424, %v495
    %v497 = vpop.f32.mrb[0].mxu0
    %498 = vdwg.mxu0
    %vm499 = vcmask 1043456
    %v500 = vsel %vm499, %v496, -inf
    %v501 = vrot.slane %v500, 4
    %v502 = vmax.f32 %v500, %v501
    %v503 = vrot.slane %v502, 2
    %v504 = vmax.f32 %v502, %v503
    %v505 = vrot.slane %v504, 1
    %v506 = vmax.f32 %v504, %v505
    %v507 = vsub.f32 %v496, %v506
    %v508 = vmul.f32 %v507, 1.442695
    %v509 = vpow.pop %v508
    %v510 = vsel %vm499, %v509, 0.0
    %v511 = vrot.slane %v510, 4
    %v512 = vadd.f32 %v510, %v511
    %v513 = vrot.slane %v512, 2
    %v514 = vadd.f32 %v512, %v513
    %v515 = vrot.slane %v514, 1
    %v516 = vadd.f32 %v514, %v515
    %v517 = vrcp.pop %v516
    %v518 = vmul.f32 %v509, %v517
    %v519 = vlog2.pop %v516
    %v520 = vmul.f32 %v519, 0.6931472
    %v521 = vsub.f32 %v507, %v520
    %v522 = vmul.f32 %v518, %v521
    %v523 = vsel %vm499, %v522, 0.0
    %v524 = vrot.slane %v523, 4
    %v525 = vadd.f32 %v523, %v524
    %v526 = vrot.slane %v525, 2
    %v527 = vadd.f32 %v525, %v526
    %v528 = vrot.slane %v527, 1
    %v529 = vadd.f32 %v527, %v528
    %v530 = vsub.f32 0.0, %v529
    %v531 = vld [vmem:[%s1] sm:$0x1]
    %v532 = vlaneseq
    %v533 = vshrl.u32 %v532, 7
    %v534 = vlaneseq
    %v535 = vshrl.u32 %v534, 7
    %v536 = vsub.s32 0, %v535
    %v537 = vrot.slane %v531, %v536
    %vm538 = vcmp.eq.s32.totalorder %v533, %v537
    %v539 = vsel %vm538, 1, 0
    %v540 = vcvt.s32.f32 %v539
    %v541 = vmul.f32 %v540, %v521
    %v542 = vsel %vm499, %v541, 0.0
    %v543 = vrot.slane %v542, 4
    %v544 = vadd.f32 %v542, %v543
    %v545 = vrot.slane %v544, 2
    %v546 = vadd.f32 %v544, %v545
    %v547 = vrot.slane %v546, 1
    %v548 = vadd.f32 %v546, %v547
    %vm549 = vcmp.eq.s32.totalorder %v533, 0
    %vm550 = vcmp.eq.s32.totalorder %v533, 1
    %vm551 = vcmp.eq.s32.totalorder %v533, 2
    %v552 = vsel %vm551, %v530, 0.0
    %v553 = vlaneseq
    %v554 = vshrl.u32 %v553, 7
    %v555 = vsub.s32 4, %v554
    %v556 = vrot.slane %v496, %v555
    %v557 = vsel %vm550, %v556, %v552
    %v558 = vsel %vm549, %v548, %v557
    %559 = vst [vmem:[#allocation2] sm:$0xff] %v558
    // Predicated region
    $region34: #{tpu_custom_call.1} parent=1 // pred_check
      _
    $region35: #{tpu_custom_call.1} parent=1 // pred_check_branch
      %561 = sbr.rel (0) target = $region37
    $region36: #{tpu_custom_call.1} parent=1 // pred_region
      %s563 = ssub.s32 128, 128
      %564 = vsyncadd [#allocation3], %s563
      %s566 = sshll.u32 [#allocation2], 4
      %s567 = int_to_ptr.vmem [resolvable:$true] %s566
      %569 = dma.vmem_to_hbm [thread:$0]  %s567, 128, %s8, [#allocation3]
    $region37: #{tpu_custom_call.1} parent=1 // pred_fallthru
      _
    // Predicated region
    $region38: #{tpu_custom_call.1} parent=1 // pred_check
      _
    $region39: #{tpu_custom_call.1} parent=1 // pred_check_branch
      %571 = sbr.rel (0) target = $region41
    $region40: #{tpu_custom_call.1} parent=1 // pred_region
      %572 = dma.done [#allocation3], 128
    $region41: #{tpu_custom_call.1} parent=1 // pred_fallthru
      _
    %573 = vsyncpa [#allocation3], 1

</llo_original>
